<compile_context>
chip_gen: v7x
topology: tpu7x:2x2x1
jax: 0.10.0
libtpu: 0.0.40
codegen_flags: <defaults>
</compile_context>

<pallas_src>
import jax
import jax.numpy as jnp
from jax.experimental import pallas as pl
from jax.experimental.pallas import tpu as pltpu


def _round_up(x, m):
    return ((x + m - 1) // m) * m


def _mlp_kernel(x_ref, w1_ref, b1_ref, w2_ref, b2_ref, o_ref):
    # x:  (TB, obs_dim)        f32  -- cast to bf16 in-kernel (VPU, free)
    # w1: (obs_dim, hidden)    f32  (resident across grid steps)
    # b1: (1, hidden)          f32
    # w2: (hidden, action_dim) f32  (resident)
    # b2: (1, action_dim)      f32
    # o:  (TB, action_dim)     f32
    x = x_ref[...].astype(jnp.bfloat16)
    w1 = w1_ref[...].astype(jnp.bfloat16)
    h = jnp.dot(x, w1, preferred_element_type=jnp.float32)        # (TB, hidden)
    h = jnp.maximum(h + b1_ref[...], 0.0)                         # bias + ReLU (f32)

    w2 = w2_ref[...].astype(jnp.bfloat16)
    y = jnp.dot(h.astype(jnp.bfloat16), w2,
                preferred_element_type=jnp.float32)               # (TB, action_dim)
    y = jax.nn.sigmoid(y + b2_ref[...])                           # f32 epilogue (EUP)
    o_ref[...] = y.astype(o_ref.dtype)


def modifier_policy_forward(x, w1, b1, w2, b2, *, tile_b=None):
    """2-layer MLP forward: sigmoid(relu(x @ W1 + b1) @ W2 + b2).

    x:  (batch, obs_dim) f32
    w1: (obs_dim, hidden), b1: (1, hidden)
    w2: (hidden, action_dim), b2: (1, action_dim)
    returns (batch, action_dim) f32
    """
    batch, obs_dim = x.shape
    hidden = w1.shape[1]
    action_dim = w2.shape[1]

    # Harden caller-supplied tile sizes: multiple of 128, >= 128.
    cap = 4096 if tile_b is None else max(128, _round_up(int(tile_b), 128))

    if batch <= cap:
        # Single block with block_shape == array shape: no padding, no
        # divisibility constraint, weights read once.
        tb = batch
    else:
        # Balance tiles so the ragged boundary block wastes <= ~128 rows.
        n = pl.cdiv(batch, cap)
        tb = _round_up(pl.cdiv(batch, n), 128)
    grid = pl.cdiv(batch, tb)

    return pl.pallas_call(
        _mlp_kernel,
        out_shape=jax.ShapeDtypeStruct((batch, action_dim), jnp.float32),
        grid=(grid,),
        in_specs=[
            pl.BlockSpec((tb, obs_dim), lambda i: (i, 0)),          # x tile
            pl.BlockSpec((obs_dim, hidden), lambda i: (0, 0)),      # W1 resident
            pl.BlockSpec((1, hidden), lambda i: (0, 0)),            # b1 resident
            pl.BlockSpec((hidden, action_dim), lambda i: (0, 0)),   # W2 resident
            pl.BlockSpec((1, action_dim), lambda i: (0, 0)),        # b2 resident
        ],
        out_specs=pl.BlockSpec((tb, action_dim), lambda i: (i, 0)),
        compiler_params=pltpu.CompilerParams(
            dimension_semantics=("parallel",),
            vmem_limit_bytes=32 * 1024 * 1024,   # lift v5e's 16 MiB scoped default
        ),
    )(x, w1, b1, w2, b2)


def reference_forward_bf16(x, w1, b1, w2, b2):
    """Plain-JAX reference with the same bf16-input / f32-accumulate pipeline."""
    h = jnp.dot(x.astype(jnp.bfloat16), w1.astype(jnp.bfloat16),
                preferred_element_type=jnp.float32) + b1
    h = jnp.maximum(h, 0.0)
    y = jnp.dot(h.astype(jnp.bfloat16), w2.astype(jnp.bfloat16),
                preferred_element_type=jnp.float32) + b2
    return jax.nn.sigmoid(y)


def reference_forward_f32(x, w1, b1, w2, b2):
    h = jnp.maximum(x @ w1 + b1, 0.0)
    return jax.nn.sigmoid(h @ w2 + b2)


def init_params(key, obs_dim, action_dim, hidden=32, dtype=jnp.float32):
    """Deterministic synthetic init (PyTorch-like uniform fan-in scaling)."""
    k1, k2, k3, k4 = jax.random.split(key, 4)
    lim1 = 1.0 / jnp.sqrt(obs_dim)
    lim2 = 1.0 / jnp.sqrt(hidden)
    w1 = jax.random.uniform(k1, (obs_dim, hidden), dtype, -lim1, lim1)
    b1 = jax.random.uniform(k2, (1, hidden), dtype, -lim1, lim1)
    w2 = jax.random.uniform(k3, (hidden, action_dim), dtype, -lim2, lim2)
    b2 = jax.random.uniform(k4, (1, action_dim), dtype, -lim2, lim2)
    return w1, b1, w2, b2


if __name__ == "__main__":
    obs_dim, action_dim, hidden = 16, 4, 32

    key = jax.random.PRNGKey(0)
    kx1, kx2, kx3, kp = jax.random.split(key, 4)
    w1, b1, w2, b2 = init_params(kp, obs_dim, action_dim, hidden)

    # 1) Small batch: single resident block (block shape == array shape).
    x1 = jax.random.normal(kx1, (8, obs_dim), jnp.float32)
    out1 = jax.block_until_ready(modifier_policy_forward(x1, w1, b1, w2, b2))
    assert out1.shape == (8, action_dim)
    assert jnp.allclose(out1, reference_forward_bf16(x1, w1, b1, w2, b2),
                        atol=2e-3), "mismatch vs bf16 reference (small batch)"
    assert jnp.allclose(out1, reference_forward_f32(x1, w1, b1, w2, b2),
                        atol=3e-2), "mismatch vs f32 reference (small batch)"

    # 2) Ragged multi-tile batch: exercises the tiled grid, resident weights
    #    across steps, and the masked boundary block (no jnp.pad anywhere).
    x2 = jax.random.normal(kx2, (300, obs_dim), jnp.float32)
    out2 = jax.block_until_ready(
        modifier_policy_forward(x2, w1, b1, w2, b2, tile_b=128))
    assert out2.shape == (300, action_dim)
    assert jnp.allclose(out2, reference_forward_bf16(x2, w1, b1, w2, b2),
                        atol=2e-3), "mismatch vs reference (ragged tiled)"

    # 3) Evenly divisible multi-tile batch (no boundary masking).
    x3 = jax.random.normal(kx3, (512, obs_dim), jnp.float32)
    out3 = jax.block_until_ready(
        modifier_policy_forward(x3, w1, b1, w2, b2, tile_b=256))
    assert out3.shape == (512, action_dim)
    assert jnp.allclose(out3, reference_forward_bf16(x3, w1, b1, w2, b2),
                        atol=2e-3), "mismatch vs reference (even tiled)"

    print("KERNEL_OK")
</pallas_src>

<mosaic_0001>
module attributes {stable_mosaic.version = 11 : i64} {
  func.func @_mlp_kernel(%arg0: i32, %arg1: memref<8x16xf32, #tpu.memory_space<vmem>>, %arg2: memref<16x32xf32, #tpu.memory_space<vmem>>, %arg3: memref<1x32xf32, #tpu.memory_space<vmem>>, %arg4: memref<32x4xf32, #tpu.memory_space<vmem>>, %arg5: memref<1x4xf32, #tpu.memory_space<vmem>>, %arg6: memref<8x4xf32, #tpu.memory_space<vmem>>) attributes {dimension_semantics = [#tpu.dimension_semantics<parallel>], iteration_bounds = array<i64: 1>, scalar_prefetch = 0 : i64, scratch_operands = 0 : i64, tpu.core_type = #tpu.core_type<tc>, window_params = [{transform_indices = @transform_0, window_bounds = array<i64: 8, 16>}, {pipeline_mode = #tpu.pipeline_mode<synchronous>, transform_indices = @transform_1, window_bounds = array<i64: 16, 32>}, {pipeline_mode = #tpu.pipeline_mode<synchronous>, transform_indices = @transform_2, window_bounds = array<i64: 1, 32>}, {pipeline_mode = #tpu.pipeline_mode<synchronous>, transform_indices = @transform_3, window_bounds = array<i64: 32, 4>}, {pipeline_mode = #tpu.pipeline_mode<synchronous>, transform_indices = @transform_4, window_bounds = array<i64: 1, 4>}, {transform_indices = @transform_5, window_bounds = array<i64: 8, 4>}]} {
    %c0 = arith.constant 0 : index
    %c0_0 = arith.constant 0 : index
    %0 = vector.load %arg1[%c0, %c0_0] : memref<8x16xf32, #tpu.memory_space<vmem>>, vector<8x16xf32>
    %1 = arith.truncf %0 : vector<8x16xf32> to vector<8x16xbf16>
    %c0_1 = arith.constant 0 : index
    %c0_2 = arith.constant 0 : index
    %2 = vector.load %arg2[%c0_1, %c0_2] : memref<16x32xf32, #tpu.memory_space<vmem>>, vector<16x32xf32>
    %3 = arith.truncf %2 : vector<16x32xf32> to vector<16x32xbf16>
    %cst = arith.constant dense<0.000000e+00> : vector<8x32xf32>
    %4 = tpu.matmul %1, %3, %cst {dimension_numbers = #tpu.dot_dimension_numbers<[1], [0], [0], [1], [0, 0, 1, 1], [], []>} : vector<8x16xbf16>, vector<16x32xbf16>, vector<8x32xf32> -> vector<8x32xf32>
    %c0_3 = arith.constant 0 : index
    %c0_4 = arith.constant 0 : index
    %5 = vector.load %arg3[%c0_3, %c0_4] : memref<1x32xf32, #tpu.memory_space<vmem>>, vector<1x32xf32>
    %6 = vector.broadcast %5 : vector<1x32xf32> to vector<8x32xf32>
    %7 = arith.addf %4, %6 : vector<8x32xf32>
    %cst_5 = arith.constant 0.000000e+00 : f32
    %8 = vector.broadcast %cst_5 : f32 to vector<8x32xf32>
    %9 = arith.maximumf %7, %8 : vector<8x32xf32>
    %c0_6 = arith.constant 0 : index
    %c0_7 = arith.constant 0 : index
    %10 = vector.load %arg4[%c0_6, %c0_7] : memref<32x4xf32, #tpu.memory_space<vmem>>, vector<32x4xf32>
    %11 = arith.truncf %10 : vector<32x4xf32> to vector<32x4xbf16>
    %12 = arith.truncf %9 : vector<8x32xf32> to vector<8x32xbf16>
    %cst_8 = arith.constant dense<0.000000e+00> : vector<8x4xf32>
    %13 = tpu.matmul %12, %11, %cst_8 {dimension_numbers = #tpu.dot_dimension_numbers<[1], [0], [0], [1], [0, 0, 1, 1], [], []>} : vector<8x32xbf16>, vector<32x4xbf16>, vector<8x4xf32> -> vector<8x4xf32>
    %c0_9 = arith.constant 0 : index
    %c0_10 = arith.constant 0 : index
    %14 = vector.load %arg5[%c0_9, %c0_10] : memref<1x4xf32, #tpu.memory_space<vmem>>, vector<1x4xf32>
    %15 = vector.broadcast %14 : vector<1x4xf32> to vector<8x4xf32>
    %16 = arith.addf %13, %15 : vector<8x4xf32>
    %17 = arith.negf %16 : vector<8x4xf32>
    %18 = math.exp %17 : vector<8x4xf32>
    %cst_11 = arith.constant 1.000000e+00 : f32
    %19 = vector.broadcast %cst_11 : f32 to vector<8x4xf32>
    %20 = arith.addf %19, %18 : vector<8x4xf32>
    %21 = arith.divf %19, %20 : vector<8x4xf32>
    %c0_12 = arith.constant 0 : index
    %c0_13 = arith.constant 0 : index
    %22 = vector.load %arg6[%c0_12, %c0_13] : memref<8x4xf32, #tpu.memory_space<vmem>>, vector<8x4xf32>
    tpu.vector_store %arg6[%c0_12, %c0_13], %21 {strides = array<i32>} : memref<8x4xf32, #tpu.memory_space<vmem>>, vector<8x4xf32>,
    return
  }
  func.func @transform_0(%arg0: i32) -> (i32, i32) {
    %c0_i32 = arith.constant 0 : i32
    %c0_i32_0 = arith.constant 0 : i32
    return %arg0, %c0_i32 : i32, i32
  }
  func.func @transform_1(%arg0: i32) -> (i32, i32) {
    %c0_i32 = arith.constant 0 : i32
    %c0_i32_0 = arith.constant 0 : i32
    %c0_i32_1 = arith.constant 0 : i32
    return %c0_i32, %c0_i32_0 : i32, i32
  }
  func.func @transform_2(%arg0: i32) -> (i32, i32) {
    %c0_i32 = arith.constant 0 : i32
    %c0_i32_0 = arith.constant 0 : i32
    %c0_i32_1 = arith.constant 0 : i32
    return %c0_i32, %c0_i32_0 : i32, i32
  }
  func.func @transform_3(%arg0: i32) -> (i32, i32) {
    %c0_i32 = arith.constant 0 : i32
    %c0_i32_0 = arith.constant 0 : i32
    %c0_i32_1 = arith.constant 0 : i32
    return %c0_i32, %c0_i32_0 : i32, i32
  }
  func.func @transform_4(%arg0: i32) -> (i32, i32) {
    %c0_i32 = arith.constant 0 : i32
    %c0_i32_0 = arith.constant 0 : i32
    %c0_i32_1 = arith.constant 0 : i32
    return %c0_i32, %c0_i32_0 : i32, i32
  }
  func.func @transform_5(%arg0: i32) -> (i32, i32) {
    %c0_i32 = arith.constant 0 : i32
    %c0_i32_0 = arith.constant 0 : i32
    return %arg0, %c0_i32 : i32, i32
  }
}

</mosaic_0001>

<llo_original>
// kernel: tpu_custom_call.1
$region0: #{tpu_custom_call.1}
  #allocation0 [shape = 'u32[]', space=smem, size = 0x4, offset = 0x4, fixed_abs, tag = 'smem constant byte address 0x4 - core index']
  #allocation1 [shape = 'u32[144,128]{1,0:T(1,128)}', space=vmem, size = 0x12000, scoped, tag = 'internal scratch']
  %s0 = inlined_call_operand.vmem [shape: f32[8,16], index: 0, kind: input, shape index: {}]
  %s1 = inlined_call_operand.vmem [shape: f32[16,32], index: 1, kind: input, shape index: {}]
  %s2 = inlined_call_operand.vmem [shape: f32[1,32], index: 2, kind: input, shape index: {}]
  %s3 = inlined_call_operand.vmem [shape: f32[32,4], index: 3, kind: input, shape index: {}]
  %s4 = inlined_call_operand.vmem [shape: f32[1,4], index: 4, kind: input, shape index: {}]
  %s5 = inlined_call_operand.vmem [shape: f32[8,4], index: 5, kind: output, shape index: {}]
  %s6 = sld [smem:[#allocation0]]
  $region30: #{tpu_custom_call.1} parent=0
    _
  %s8 = ssub.s32 1, %s6
  %s9 = scalar_select 0, %s8, %s6
  // Predicated region
  $region2: #{tpu_custom_call.1} parent=0 // pred_check
    _
  $region3: #{tpu_custom_call.1} parent=0 // pred_check_branch
    %11 = sbr.rel (0) target = $region5
  $region4: #{tpu_custom_call.1} parent=0 // pred_region
    _
  $region5: #{tpu_custom_call.1} parent=0 // pred_fallthru
    _
  // Predicated region
  $region6: #{tpu_custom_call.1} parent=0 // pred_check
    _
  $region7: #{tpu_custom_call.1} parent=0 // pred_check_branch
    %13 = sbr.rel (0) target = $region9
  $region8: #{tpu_custom_call.1} parent=0 // pred_region
    _
  $region9: #{tpu_custom_call.1} parent=0 // pred_fallthru
    _
  // Predicated region
  $region10: #{tpu_custom_call.1} parent=0 // pred_check
    _
  $region11: #{tpu_custom_call.1} parent=0 // pred_check_branch
    %15 = sbr.rel (0) target = $region13
  $region12: #{tpu_custom_call.1} parent=0 // pred_region
    _
  $region13: #{tpu_custom_call.1} parent=0 // pred_fallthru
    _
  // Predicated region
  $region14: #{tpu_custom_call.1} parent=0 // pred_check
    _
  $region15: #{tpu_custom_call.1} parent=0 // pred_check_branch
    %17 = sbr.rel (0) target = $region17
  $region16: #{tpu_custom_call.1} parent=0 // pred_region
    _
  $region17: #{tpu_custom_call.1} parent=0 // pred_fallthru
    _
  // Predicated region
  $region18: #{tpu_custom_call.1} parent=0 // pred_check
    _
  $region19: #{tpu_custom_call.1} parent=0 // pred_check_branch
    %19 = sbr.rel (0) target = $region21
  $region20: #{tpu_custom_call.1} parent=0 // pred_region
    _
  $region21: #{tpu_custom_call.1} parent=0 // pred_fallthru
    _
  %v21 = vld [vmem:[%s0] sm:$0xff]
  %v22 = vpack.c.bf16 %v21, %v21
  %v23 = vld [vmem:[%s1] sm:$0xff]
  %v24 = vld [vmem:[%s1 + $0x8] sm:$0xff]
  %v25 = vpack.c.bf16 %v24, %v23
  %v26 = vld [vmem:[%s2] sm:$0x1]
  %v28 = vlaneseq
  %v29 = vshrl.u32 %v28, 7
  %v30 = vsub.s32 0, %v29
  %v31 = vrot.slane %v26, %v30
  %vm33 = vcmask 130048
  %v35 = vsel %vm33, %v22, 0
  %37 = vmatprep.subr.bf16.mxu0 0
  %38 = vmatpush1.bf16.msra.mxu0 %v25
  %39 = vmatprep.subr.bf16.mxu0 0
  %40 = vmatpush1.bf16.msra.mxu0 0
  %41 = vmatprep.subr.bf16.mxu0 0
  %42 = vmatpush1.bf16.msra.mxu0 0
  %43 = vmatprep.subr.bf16.mxu0 0
  %44 = vmatpush1.bf16.msra.mxu0 0
  %45 = vmatprep.subr.bf16.mxu0 0
  %46 = vmatpush1.bf16.msra.mxu0 0
  %47 = vmatprep.subr.bf16.mxu0 0
  %48 = vmatpush1.bf16.msra.mxu0 0
  %49 = vmatprep.subr.bf16.mxu0 0
  %50 = vmatpush1.bf16.msra.mxu0 0
  %51 = vmatprep.subr.bf16.mxu0 0
  %52 = vmatpush1.bf16.msra.mxu0 0
  %53 = vmatprep.subr.bf16.mxu0 0
  %54 = vmatpush1.bf16.msra.mxu0 0
  %55 = vmatprep.subr.bf16.mxu0 0
  %56 = vmatpush1.bf16.msra.mxu0 0
  %57 = vmatprep.subr.bf16.mxu0 0
  %58 = vmatpush1.bf16.msra.mxu0 0
  %59 = vmatprep.subr.bf16.mxu0 0
  %60 = vmatpush1.bf16.msra.mxu0 0
  %61 = vmatprep.subr.bf16.mxu0 0
  %62 = vmatpush1.bf16.msra.mxu0 0
  %63 = vmatprep.subr.bf16.mxu0 0
  %64 = vmatpush1.bf16.msra.mxu0 0
  %65 = vmatprep.subr.bf16.mxu0 0
  %66 = vmatpush1.bf16.msra.mxu0 0
  %67 = vmatprep.subr.bf16.mxu0 0
  %68 = vmatpush1.bf16.msra.mxu0 0
  %69 = vmatprep.mubr.bf16.mxu0 0
  %70 = vmatmul.mubr.bf16.gmra.mrb[0].mxu0 %v35
  %v71 = vpop.f32.mrb[0].mxu0
  %v72 = vadd.f32 %v31, %v71
  %v73 = vpop.f32.mrb[0].mxu0
  %v74 = vpop.f32.mrb[0].mxu0
  %v75 = vpop.f32.mrb[0].mxu0
  %76 = vdwg.mxu0
  %v77 = vmax.f32 %v72, 0.0
  %v78 = vld [vmem:[%s3] sm:$0xff]
  %v79 = vld [vmem:[%s3 + $0x8] sm:$0xff]
  %v80 = vld [vmem:[%s3 + $0x10] sm:$0xff]
  %v81 = vld [vmem:[%s3 + $0x18] sm:$0xff]
  %v82 = vpack.c.bf16 %v79, %v78
  %v83 = vpack.c.bf16 %v81, %v80
  %v84 = vpack.c.bf16 %v77, %v77
  %v85 = vld [vmem:[%s4] sm:$0x1]
  %v87 = vlaneseq
  %v88 = vshrl.u32 %v87, 7
  %v89 = vsub.s32 0, %v88
  %v90 = vrot.slane %v85, %v89
  %vm92 = vcmask 261120
  %v94 = vsel %vm92, %v84, 0
  %96 = vmatprep.subr.bf16.mxu0 0
  %97 = vmatpush1.bf16.msra.mxu0 %v82
  %98 = vmatprep.subr.bf16.mxu0 0
  %99 = vmatpush1.bf16.msra.mxu0 %v83
  %100 = vmatprep.subr.bf16.mxu0 0
  %101 = vmatpush1.bf16.msra.mxu0 0
  %102 = vmatprep.subr.bf16.mxu0 0
  %103 = vmatpush1.bf16.msra.mxu0 0
  %104 = vmatprep.subr.bf16.mxu0 0
  %105 = vmatpush1.bf16.msra.mxu0 0
  %106 = vmatprep.subr.bf16.mxu0 0
  %107 = vmatpush1.bf16.msra.mxu0 0
  %108 = vmatprep.subr.bf16.mxu0 0
  %109 = vmatpush1.bf16.msra.mxu0 0
  %110 = vmatprep.subr.bf16.mxu0 0
  %111 = vmatpush1.bf16.msra.mxu0 0
  %112 = vmatprep.subr.bf16.mxu0 0
  %113 = vmatpush1.bf16.msra.mxu0 0
  %114 = vmatprep.subr.bf16.mxu0 0
  %115 = vmatpush1.bf16.msra.mxu0 0
  %116 = vmatprep.subr.bf16.mxu0 0
  %117 = vmatpush1.bf16.msra.mxu0 0
  %118 = vmatprep.subr.bf16.mxu0 0
  %119 = vmatpush1.bf16.msra.mxu0 0
  %120 = vmatprep.subr.bf16.mxu0 0
  %121 = vmatpush1.bf16.msra.mxu0 0
  %122 = vmatprep.subr.bf16.mxu0 0
  %123 = vmatpush1.bf16.msra.mxu0 0
  %124 = vmatprep.subr.bf16.mxu0 0
  %125 = vmatpush1.bf16.msra.mxu0 0
  %126 = vmatprep.subr.bf16.mxu0 0
  %127 = vmatpush1.bf16.msra.mxu0 0
  %128 = vmatprep.mubr.bf16.mxu0 0
  %129 = vmatmul.mubr.bf16.gmra.mrb[0].mxu0 %v94
  %v130 = vpop.f32.mrb[0].mxu0
  %v131 = vadd.f32 %v90, %v130
  %v132 = vpop.f32.mrb[0].mxu0
  %v133 = vpop.f32.mrb[0].mxu0
  %v134 = vpop.f32.mrb[0].mxu0
  %135 = vdwg.mxu0
  %v136 = vxor.u32 %v131, 2147483648
  %v137 = vmul.f32 %v136, 1.442695
  %v138 = vpow.pop %v137
  %v139 = vadd.f32 %v138, 1.0
  %v140 = vrcp.pop %v139
  %v141 = vmul.f32 1.0, %v140
  %vm142 = vcmask 31744
  %143 = vst.msk [vmem:[%s5] sm:$0xff] %vm142, %v141
  // Predicated region
  $region22: #{tpu_custom_call.1} parent=0 // pred_check
    _
  $region23: #{tpu_custom_call.1} parent=0 // pred_check_branch
    %145 = sbr.rel (0) target = $region25
  $region24: #{tpu_custom_call.1} parent=0 // pred_region
    _
  $region25: #{tpu_custom_call.1} parent=0 // pred_fallthru
    _
  // Predicated region
  $region26: #{tpu_custom_call.1} parent=0 // pred_check
    _
  $region27: #{tpu_custom_call.1} parent=0 // pred_check_branch
    %147 = sbr.rel (0) target = $region29
  $region28: #{tpu_custom_call.1} parent=0 // pred_region
    _
  $region29: #{tpu_custom_call.1} parent=0 // pred_fallthru
    _

</llo_original>
